<compile_context>
chip_gen: v7x
topology: tpu7x:2x2x1
jax: 0.10.0
libtpu: 0.0.40
codegen_flags: <defaults>
</compile_context>

<pallas_src>
import functools
import math

import jax
import jax.numpy as jnp
from jax import lax
from jax.experimental import pallas as pl
from jax.experimental.pallas import tpu as pltpu


_DEFAULTS = {"arcface": (64.0, 0.5), "sphereface": (64.0, 1.35), "cosface": (30.0, 0.4)}


def _round_up(v, m):
    return (v + m - 1) // m * m


def _vmem_budget():
    """Per-generation VMEM sizing (v5e/v6e: 128 MiB physical, v7x: 64 MiB)."""
    try:
        cap = int(pltpu.get_tpu_info().vmem_capacity_bytes)
    except Exception:  # not on TPU / query unavailable -> conservative (v7x-sized)
        cap = 64 * 1024 * 1024
    vmem_limit = int(cap * 3 // 4)      # scoped VMEM limit handed to Mosaic
    tile_budget = int(cap // 2)         # conservative working-set budget for tiling
    return vmem_limit, tile_budget


def _choose_tiles(n, c, d, w_bytes, loss_path, budget, force_resident):
    """Lane-dense class tiles (multiple of 128, minimal padding), large sublane-
    aligned row tiles (weight-stream amortization), dtype-aware VMEM budgeting."""
    c_pad = _round_up(c, 128)
    divisors = [t for t in (512, 384, 256, 128) if c_pad % t == 0]  # always has 128

    n8 = _round_up(max(n, 1), 8)
    if n >= 16:
        # >= 2 N tiles so the "parallel" axis feeds both v7x TensorCores.
        tile_n = min(1024, _round_up(-(-n // 2), 8))
    else:
        tile_n = n8
    tile_n = min(tile_n, n8)

    if force_resident is None:
        w_resident = 2 * c_pad * d * w_bytes <= budget // 3
    else:
        w_resident = bool(force_resident)

    def working_set(tn, tc):
        ws = 2 * tn * d * 4                      # x tile (f32), double-buffered
        ws += tn * d * w_bytes                   # cached normalized-x scratch
        if w_resident:
            ws += 2 * c_pad * d * w_bytes        # resident weight (worst case 2 bufs)
        else:
            ws += 2 * d * tc * w_bytes           # streamed weight tile, double-buffered
        ws += tn * tc * 4                        # (s*)wf intermediate, f32
        if loss_path:
            ws += 4 * tn * 4                     # per-row accumulator outputs
        else:
            ws += 2 * tn * tc * 4                # wf output tile, double-buffered
        return ws

    # Shrink the class tile first (keeps TILE_N big), then the row tile.
    tile_c = divisors[-1]
    for tc in divisors:
        if working_set(tile_n, tc) <= budget:
            tile_c = tc
            break
    while tile_n > 8 and working_set(tile_n, tile_c) > budget:
        tile_n = max(8, _round_up(tile_n // 2, 8))
    return tile_n, tile_c, c_pad, w_resident


# ---------------------------------------------------------------------------
# Kernels
# ---------------------------------------------------------------------------
def _loss_kernel(x_ref, w_ref, lab_ref, tgt_ref, excl_ref, xn_ref, *,
                 s, n_classes, c_pad, tile_c, w_resident):
    """Grid = (N tiles ["parallel"], C tiles ["arbitrary", last]).

    x_ref:    (TILE_N, D) f32          (resident across the C axis)
    w_ref:    (D, TILE_C) streamed tile, or (C_tiles, D, TILE_C) fully resident
    lab_ref:  (TILE_N, 1) i32
    tgt_ref:  (TILE_N, 1) f32 output   accumulates s * wf[target]
    excl_ref: (TILE_N, 1) f32 output   accumulates sum_{j!=label, j<C} exp(s*wf[:,j])
    xn_ref:   (TILE_N, D) mxu_dtype scratch -> s * normalize(x), computed once
    """
    c_idx = pl.program_id(1)

    @pl.when(c_idx == 0)
    def _init():
        # F.normalize(x, p=2, dim=1) == x * rsqrt(max(ss, 1e-24)); s folded in.
        x = x_ref[...].astype(jnp.float32)
        inv = lax.rsqrt(jnp.maximum(jnp.sum(x * x, axis=1, keepdims=True), 1e-24))
        xn_ref[...] = (x * (s * inv)).astype(xn_ref.dtype)
        tgt_ref[...] = jnp.zeros_like(tgt_ref)
        excl_ref[...] = jnp.zeros_like(excl_ref)

    if w_resident:
        w_tile = w_ref[c_idx]        # (D, TILE_C) slice of the VMEM-resident weight
    else:
        w_tile = w_ref[...]          # (D, TILE_C) streamed tile

    # s * wf tile on the MXU, f32 accumulation. Weight intentionally NOT
    # normalized (the reference's `W = F.normalize(W)` loop does nothing).
    wf_s = jnp.dot(xn_ref[...], w_tile, preferred_element_type=jnp.float32)

    labels = lab_ref[...]                                                  # (TILE_N, 1)
    col = c_idx * tile_c + lax.broadcasted_iota(jnp.int32, wf_s.shape, 1)  # global class
    onehot = col == labels

    # Target logit (scaled by s); exactly one C tile contributes per real row.
    tgt_ref[...] += jnp.sum(jnp.where(onehot, wf_s, 0.0), axis=1, keepdims=True)

    # Padded weight columns are exactly zero -> wf_s == 0 -> exp == 1 (no overflow).
    e = jnp.exp(wf_s)
    if c_pad == n_classes:
        # No padded classes at all: one-hot exclusion only.
        excl_ref[...] += jnp.sum(jnp.where(onehot, 0.0, e), axis=1, keepdims=True)
    else:
        is_last = c_idx == pl.num_programs(1) - 1

        @pl.when(jnp.logical_not(is_last))
        def _interior():  # interior tiles have no padded columns: skip `valid` mask
            excl_ref[...] += jnp.sum(jnp.where(onehot, 0.0, e), axis=1, keepdims=True)

        @pl.when(is_last)
        def _last():      # mask out the <= 127 padded classes in the final tile
            keep = jnp.logical_and(col < n_classes, jnp.logical_not(onehot))
            excl_ref[...] += jnp.sum(jnp.where(keep, e, 0.0), axis=1, keepdims=True)


def _wf_kernel(x_ref, w_ref, wf_ref, xn_ref, *, w_resident):
    """labels=None path: wf tile = normalize(x) @ W^T (normalization hoisted)."""
    c_idx = pl.program_id(1)

    @pl.when(c_idx == 0)
    def _init():
        x = x_ref[...].astype(jnp.float32)
        inv = lax.rsqrt(jnp.maximum(jnp.sum(x * x, axis=1, keepdims=True), 1e-24))
        xn_ref[...] = (x * inv).astype(xn_ref.dtype)

    w_tile = w_ref[c_idx] if w_resident else w_ref[...]
    wf_ref[...] = jnp.dot(xn_ref[...], w_tile, preferred_element_type=jnp.float32)


# ---------------------------------------------------------------------------
# Wrapper
# ---------------------------------------------------------------------------
def angular_penalty_sm_loss(x, weight, labels=None, *, loss_type="arcface",
                            s=None, m=None, eps=1e-7,
                            mxu_dtype=jnp.float32, w_resident=None,
                            canonical_margin=False):
    """x: (N, in_features) f32; weight: (out_features, in_features) f32 (nn.Linear
    layout); labels: (N,) int or None.

    Returns wf (N, out_features) if labels is None, else the scalar loss — exactly
    like the PyTorch module's forward (which hard-codes the ArcFace numerator for
    every loss_type; set canonical_margin=True for textbook sphereface/cosface).

    mxu_dtype=jnp.bfloat16 runs the weight DMA + matmul in bf16 with f32
    accumulation — the fast path on ALL TPU generations (v5e/v6e/v7x are all
    bf16-native on the MXU; post-matmul math stays f32). Default is f32 only for
    bit-level parity with the f32 PyTorch reference.

    w_resident: None = auto (keep the whole weight VMEM-resident if it fits),
    True/False to force.
    """
    loss_type = loss_type.lower()
    assert loss_type in _DEFAULTS
    s_def, m_def = _DEFAULTS[loss_type]
    # Mirror the PyTorch falsy check exactly (s=0 / m=0 fall back to defaults).
    s = s_def if not s else float(s)
    m = m_def if not m else float(m)

    n, d = x.shape
    c = weight.shape[0]
    w_bytes = 2 if mxu_dtype == jnp.bfloat16 else 4
    loss_path = labels is not None

    vmem_limit, budget = _vmem_budget()
    tile_n, tile_c, c_pad, resident = _choose_tiles(
        n, c, d, w_bytes, loss_path, budget, w_resident)
    n_pad = _round_up(n, tile_n)
    grid = (n_pad // tile_n, c_pad // tile_c)

    xp = x.astype(jnp.float32)
    if n_pad != n:
        xp = jnp.pad(xp, ((0, n_pad - n), (0, 0)))

    # Weight pre-processing (single fused XLA pass over the weight): dtype cast
    # (bf16 halves DMA bytes), transpose to (D, C) so the MXU sees the natural
    # (TILE_N,D)@(D,TILE_C) orientation (no per-tile transpose), lane-pad C.
    wq = weight.astype(mxu_dtype).T                       # (D, C)
    if c_pad != c:
        wq = jnp.pad(wq, ((0, 0), (0, c_pad - c)))
    if resident:
        # (C_tiles, D, TILE_C): fetched into VMEM once for the entire grid
        # (constant index_map); the kernel picks tiles with a leading index.
        wq = wq.reshape(d, grid[1], tile_c).transpose(1, 0, 2)
        w_spec = pl.BlockSpec((grid[1], d, tile_c), lambda i, j: (0, 0, 0))
    else:
        w_spec = pl.BlockSpec((d, tile_c), lambda i, j: (0, j))
        # TODO(synk): if the weight DMA is still exposed on v7x, sweep
        # pipeline_mode=pl.Buffered(3) on this spec within the VMEM budget.

    x_spec = pl.BlockSpec((tile_n, d), lambda i, j: (i, 0))
    compiler_params = pltpu.CompilerParams(
        dimension_semantics=("parallel", "arbitrary"),
        vmem_limit_bytes=vmem_limit)
    w_stream_passes = 1 if resident else grid[0]

    if not loss_path:
        cost = pl.CostEstimate(
            flops=int(2 * n_pad * d * c_pad),
            transcendentals=int(n_pad),
            bytes_accessed=int(n_pad * d * 4 + w_stream_passes * c_pad * d * w_bytes
                               + n_pad * c_pad * 4))
        wf = pl.pallas_call(
            functools.partial(_wf_kernel, w_resident=resident),
            out_shape=jax.ShapeDtypeStruct((n_pad, c_pad), jnp.float32),
            grid=grid,
            in_specs=[x_spec, w_spec],
            out_specs=pl.BlockSpec((tile_n, tile_c), lambda i, j: (i, j)),
            scratch_shapes=[pltpu.VMEM((tile_n, d), mxu_dtype)],
            compiler_params=compiler_params,
            cost_estimate=cost,
        )(xp, wq)
        return wf[:n, :c]

    lab = labels.astype(jnp.int32).reshape(-1)
    if n_pad != n:
        lab = jnp.pad(lab, (0, n_pad - n))
    lab2d = lab.reshape(n_pad, 1)

    kernel = functools.partial(_loss_kernel, s=s, n_classes=c, c_pad=c_pad,
                               tile_c=tile_c, w_resident=resident)
    cost = pl.CostEstimate(
        flops=int(2 * n_pad * d * c_pad),
        transcendentals=int(n_pad * c_pad + n_pad),
        bytes_accessed=int(n_pad * d * 4 + w_stream_passes * c_pad * d * w_bytes
                           + n_pad * 3 * 4))

    tgt_s, excl = pl.pallas_call(
        kernel,
        out_shape=(jax.ShapeDtypeStruct((n_pad, 1), jnp.float32),
                   jax.ShapeDtypeStruct((n_pad, 1), jnp.float32)),
        grid=grid,
        in_specs=[x_spec, w_spec, pl.BlockSpec((tile_n, 1), lambda i, j: (i, 0))],
        out_specs=(pl.BlockSpec((tile_n, 1), lambda i, j: (i, 0)),
                   pl.BlockSpec((tile_n, 1), lambda i, j: (i, 0))),
        scratch_shapes=[pltpu.VMEM((tile_n, d), mxu_dtype)],
        compiler_params=compiler_params,
        cost_estimate=cost,
    )(xp, wq, lab2d)

    # O(N) per-row epilogue in plain JAX (negligible): works for every loss_type
    # and keeps acos lowering out of the kernel. Padded rows are sliced off.
    cos_t = tgt_s[:n, 0] / s
    excl = excl[:n, 0]
    cc = jnp.clip(cos_t, -1.0 + eps, 1.0 - eps)
    if canonical_margin and loss_type == "sphereface":
        numerator = s * jnp.cos(m * jnp.arccos(cc))
    elif canonical_margin and loss_type == "cosface":
        numerator = s * (cc - m)
    else:
        # The reference module's forward uses this (ArcFace) numerator for all
        # three loss_types — reproduce it exactly by default.
        numerator = s * jnp.cos(jnp.arccos(cc) + m)
    L = numerator - jnp.log(jnp.exp(numerator) + excl)
    return -jnp.mean(L)


# ---------------------------------------------------------------------------
# Pure-JAX reference (mirrors the PyTorch forward exactly) for validation
# ---------------------------------------------------------------------------
def _reference(x, weight, labels, s, m, eps):
    xn = x / jnp.maximum(jnp.linalg.norm(x, axis=1, keepdims=True), 1e-12)
    wf = xn @ weight.T
    tgt = wf[jnp.arange(x.shape[0]), labels]
    num = s * jnp.cos(jnp.arccos(jnp.clip(tgt, -1.0 + eps, 1.0 - eps)) + m)
    onehot = jax.nn.one_hot(labels, weight.shape[0], dtype=bool)
    excl = jnp.sum(jnp.where(onehot, 0.0, jnp.exp(s * wf)), axis=1)
    L = num - jnp.log(jnp.exp(num) + excl)
    return -jnp.mean(L), wf


if __name__ == "__main__":
    key = jax.random.PRNGKey(0)
    k_x, k_w, k_l, k_x2, k_w2, k_l2 = jax.random.split(key, 6)

    # ---- case 1: module-sized small shapes, resident-weight path ------------
    N, IN_FEATURES, OUT_FEATURES = 8, 32, 16
    x = jax.random.normal(k_x, (N, IN_FEATURES), dtype=jnp.float32)
    bound = 1.0 / math.sqrt(IN_FEATURES)   # nn.Linear default init
    weight = jax.random.uniform(k_w, (OUT_FEATURES, IN_FEATURES),
                                minval=-bound, maxval=bound, dtype=jnp.float32)
    labels = jax.random.randint(k_l, (N,), 0, OUT_FEATURES, dtype=jnp.int32)

    ref_loss, ref_wf = _reference(x, weight, labels, s=64.0, m=0.5, eps=1e-7)

    wf_only = angular_penalty_sm_loss(x, weight, None)          # labels=None path
    loss = angular_penalty_sm_loss(x, weight, labels, loss_type="arcface")
    jax.block_until_ready((wf_only, loss))
    assert wf_only.shape == (N, OUT_FEATURES)
    assert jnp.allclose(wf_only, ref_wf, rtol=1e-5, atol=1e-5)
    assert jnp.allclose(loss, ref_loss, rtol=1e-4, atol=1e-4)

    # cosface in the reference module only changes the s/m defaults.
    ref_loss_cos, _ = _reference(x, weight, labels, s=30.0, m=0.4, eps=1e-7)
    loss_cos = angular_penalty_sm_loss(x, weight, labels, loss_type="cosface")
    jax.block_until_ready(loss_cos)
    assert jnp.allclose(loss_cos, ref_loss_cos, rtol=1e-4, atol=1e-4)

    # bf16 MXU fast path (all generations): loose checks (s=64 amplifies bf16).
    wf_bf16 = angular_penalty_sm_loss(x, weight, None, mxu_dtype=jnp.bfloat16)
    loss_bf16 = angular_penalty_sm_loss(x, weight, labels, mxu_dtype=jnp.bfloat16)
    jax.block_until_ready((wf_bf16, loss_bf16))
    assert jnp.allclose(wf_bf16, ref_wf, atol=3e-2)
    assert bool(jnp.isfinite(loss_bf16))

    # ---- case 2: row padding + multi-C-tile + streamed-weight path ----------
    N2, IN2, OUT2 = 20, 48, 600
    x2 = jax.random.normal(k_x2, (N2, IN2), dtype=jnp.float32)
    bound2 = 1.0 / math.sqrt(IN2)
    w2 = jax.random.uniform(k_w2, (OUT2, IN2), minval=-bound2, maxval=bound2,
                            dtype=jnp.float32)
    lab2 = jax.random.randint(k_l2, (N2,), 0, OUT2, dtype=jnp.int32)
    ref_loss2, ref_wf2 = _reference(x2, w2, lab2, s=64.0, m=0.5, eps=1e-7)

    wf2 = angular_penalty_sm_loss(x2, w2, None, w_resident=False)
    loss2 = angular_penalty_sm_loss(x2, w2, lab2, w_resident=False)
    jax.block_until_ready((wf2, loss2))
    assert jnp.allclose(wf2, ref_wf2, rtol=1e-5, atol=1e-5)
    assert jnp.allclose(loss2, ref_loss2, rtol=1e-4, atol=1e-4)

    print("KERNEL_OK")
</pallas_src>

<mosaic_0001>
module attributes {stable_mosaic.version = 11 : i64} {
  func.func @_wf_kernel(%arg0: i32, %arg1: i32, %arg2: memref<8x32xf32, #tpu.memory_space<vmem>>, %arg3: memref<1x32x128xf32, #tpu.memory_space<vmem>>, %arg4: memref<8x128xf32, #tpu.memory_space<vmem>>, %arg5: memref<8x32xf32, #tpu.memory_space<vmem>>) attributes {dimension_semantics = [#tpu.dimension_semantics<parallel>, #tpu.dimension_semantics<arbitrary>], iteration_bounds = array<i64: 1, 1>, scalar_prefetch = 0 : i64, scratch_operands = 1 : i64, tpu.core_type = #tpu.core_type<tc>, window_params = [{transform_indices = @transform_0, window_bounds = array<i64: 8, 32>}, {pipeline_mode = #tpu.pipeline_mode<synchronous>, transform_indices = @transform_1, window_bounds = array<i64: 1, 32, 128>}, {transform_indices = @transform_2, window_bounds = array<i64: 8, 128>}]} {
    %c0_i32 = arith.constant 0 : i32
    %0 = arith.cmpi eq, %arg1, %c0_i32 : i32
    %1 = arith.extui %0 : i1 to i32
    %c0_i32_0 = arith.constant 0 : i32
    %2 = arith.cmpi ne, %1, %c0_i32_0 : i32
    scf.if %2 {
      %c0_6 = arith.constant 0 : index
      %c0_7 = arith.constant 0 : index
      %9 = vector.load %arg2[%c0_6, %c0_7] : memref<8x32xf32, #tpu.memory_space<vmem>>, vector<8x32xf32>
      %10 = arith.mulf %9, %9 : vector<8x32xf32>
      %cst_8 = arith.constant dense<0.000000e+00> : vector<8xf32>
      %11 = vector.multi_reduction <add>, %10, %cst_8 [1] : vector<8x32xf32> to vector<8xf32>
      %12 = vector.shape_cast %11 : vector<8xf32> to vector<8x1xf32>
      %cst_9 = arith.constant 1.000000e-24 : f32
      %13 = vector.broadcast %cst_9 : f32 to vector<8x1xf32>
      %14 = arith.maximumf %12, %13 : vector<8x1xf32>
      %15 = math.rsqrt %14 : vector<8x1xf32>
      %16 = vector.broadcast %15 : vector<8x1xf32> to vector<8x32xf32>
      %17 = arith.mulf %9, %16 : vector<8x32xf32>
      %c0_10 = arith.constant 0 : index
      %c0_11 = arith.constant 0 : index
      %18 = vector.load %arg5[%c0_10, %c0_11] : memref<8x32xf32, #tpu.memory_space<vmem>>, vector<8x32xf32>
      tpu.vector_store %arg5[%c0_10, %c0_11], %17 {strides = array<i32>} : memref<8x32xf32, #tpu.memory_space<vmem>>, vector<8x32xf32>,
    } else {
    }
    %3 = arith.index_cast %arg1 : i32 to index
    %c0 = arith.constant 0 : index
    %c0_1 = arith.constant 0 : index
    %4 = vector.load %arg3[%3, %c0, %c0_1] : memref<1x32x128xf32, #tpu.memory_space<vmem>>, vector<1x32x128xf32>
    %5 = vector.shape_cast %4 : vector<1x32x128xf32> to vector<32x128xf32>
    %c0_2 = arith.constant 0 : index
    %c0_3 = arith.constant 0 : index
    %6 = vector.load %arg5[%c0_2, %c0_3] : memref<8x32xf32, #tpu.memory_space<vmem>>, vector<8x32xf32>
    %cst = arith.constant dense<0.000000e+00> : vector<8x128xf32>
    %7 = tpu.matmul %6, %5, %cst {dimension_numbers = #tpu.dot_dimension_numbers<[1], [0], [0], [1], [0, 0, 1, 1], [], []>} : vector<8x32xf32>, vector<32x128xf32>, vector<8x128xf32> -> vector<8x128xf32>
    %c0_4 = arith.constant 0 : index
    %c0_5 = arith.constant 0 : index
    %8 = vector.load %arg4[%c0_4, %c0_5] : memref<8x128xf32, #tpu.memory_space<vmem>>, vector<8x128xf32>
    tpu.vector_store %arg4[%c0_4, %c0_5], %7 {strides = array<i32>} : memref<8x128xf32, #tpu.memory_space<vmem>>, vector<8x128xf32>,
    return
  }
  func.func @transform_0(%arg0: i32, %arg1: i32) -> (i32, i32) {
    %c0_i32 = arith.constant 0 : i32
    %c0_i32_0 = arith.constant 0 : i32
    return %arg0, %c0_i32 : i32, i32
  }
  func.func @transform_1(%arg0: i32, %arg1: i32) -> (i32, i32, i32) {
    %c0_i32 = arith.constant 0 : i32
    %c0_i32_0 = arith.constant 0 : i32
    %c0_i32_1 = arith.constant 0 : i32
    %c0_i32_2 = arith.constant 0 : i32
    return %c0_i32, %c0_i32_0, %c0_i32_1 : i32, i32, i32
  }
  func.func @transform_2(%arg0: i32, %arg1: i32) -> (i32, i32) {
    %c0_i32 = arith.constant 0 : i32
    return %arg0, %arg1 : i32, i32
  }
}

</mosaic_0001>

<llo_original>
// kernel: tpu_custom_call.1
$region0: #{tpu_custom_call.1}
  #allocation0 [shape = 'u32[]', space=smem, size = 0x4, offset = 0x4, fixed_abs, tag = 'smem constant byte address 0x4 - core index']
  #allocation1 [shape = 'u32[144,128]{1,0:T(1,128)}', space=vmem, size = 0x12000, scoped, tag = 'internal scratch']
  #allocation2 [shape = 'f32[8,32]{1,0:T(8,128)}', space=vmem, size = 0x1000, scoped, tag = 'scratch operand']
  %s0 = inlined_call_operand.hbm [shape: f32[8,32], index: 0, kind: input, shape index: {}]
  %s1 = inlined_call_operand.hbm [shape: f32[1,32,128], index: 1, kind: input, shape index: {}]
  %s2 = inlined_call_operand.hbm [shape: f32[8,128], index: 2, kind: output, shape index: {}]
  %s3 = sld [smem:[#allocation0]]
  $region30: #{tpu_custom_call.1} parent=0
    _
  %s5 = ssub.s32 1, %s3
  %s6 = scalar_select 0, %s5, %s3
  $region1: #{tpu_custom_call.1} parent=0
    #allocation3 [shape = 'u8[4096]{0}', space=vmem, size = 0x1000, scoped, tag = 'input window, operand 0, single buffered']
    #allocation4 [shape = 's32[1]{0}', space=sflag, size = 0x4, scoped, tag = 'scoped memory for tpu_custom_call.1']
    #allocation5 [shape = 's32[1]{0}', space=sflag, size = 0x4, scoped, tag = 'scoped memory for tpu_custom_call.1']
    #allocation6 [shape = 'u8[16384]{0}', space=vmem, size = 0x4000, scoped, tag = 'input window, operand 1, single buffered']
    #allocation7 [shape = 's32[1]{0}', space=sflag, size = 0x4, scoped, tag = 'scoped memory for tpu_custom_call.1']
    #allocation8 [shape = 'u8[4096]{0}', space=vmem, size = 0x1000, scoped, tag = 'output window, operand 0, single buffered']
    %7 = vsyncpa [#allocation4], 0
    %8 = vsyncpa [#allocation7], 0
    %9 = vsyncpa [#allocation5], 0
    // Predicated region
    $region2: #{tpu_custom_call.1} parent=1 // pred_check
      _
    $region3: #{tpu_custom_call.1} parent=1 // pred_check_branch
      %11 = sbr.rel (0) target = $region5
    $region4: #{tpu_custom_call.1} parent=1 // pred_region
      %s13 = ssub.s32 128, 128
      %14 = vsyncadd [#allocation4], %s13
      %s16 = sshll.u32 [#allocation3], 4
      %s17 = int_to_ptr.vmem [resolvable:$true] %s16
      %19 = dma.hbm_to_vmem [thread:$0]  %s0, 128, %s17, [#allocation4]
    $region5: #{tpu_custom_call.1} parent=1 // pred_fallthru
      _
    // Predicated region
    $region6: #{tpu_custom_call.1} parent=1 // pred_check
      _
    $region7: #{tpu_custom_call.1} parent=1 // pred_check_branch
      %21 = sbr.rel (0) target = $region9
    $region8: #{tpu_custom_call.1} parent=1 // pred_region
      %s23 = ssub.s32 512, 512
      %24 = vsyncadd [#allocation7], %s23
      %s25 = sshll.u32 [#allocation6], 4
      %s26 = int_to_ptr.vmem [resolvable:$true] %s25
      %31 = dma.hbm_to_vmem [thread:$0]  %s1, 512, %s26, [#allocation7], 128, 128, 8
    $region9: #{tpu_custom_call.1} parent=1 // pred_fallthru
      _
    // Predicated region
    $region10: #{tpu_custom_call.1} parent=1 // pred_check
      _
    $region11: #{tpu_custom_call.1} parent=1 // pred_check_branch
      %33 = sbr.rel (0) target = $region13
    $region12: #{tpu_custom_call.1} parent=1 // pred_region
      %34 = dma.done [#allocation4], 128
    $region13: #{tpu_custom_call.1} parent=1 // pred_fallthru
      _
    // Predicated region
    $region14: #{tpu_custom_call.1} parent=1 // pred_check
      _
    $region15: #{tpu_custom_call.1} parent=1 // pred_check_branch
      %36 = sbr.rel (0) target = $region17
    $region16: #{tpu_custom_call.1} parent=1 // pred_region
      %37 = dma.done [#allocation7], 512
    $region17: #{tpu_custom_call.1} parent=1 // pred_fallthru
      _
    %p38 = scmp.eq.s32.totalorder 0, 0
    // Predicated region
    $region18: #{tpu_custom_call.1} parent=1 // pred_check
      %p39 = pneg %p38
    $region19: #{tpu_custom_call.1} parent=1 // pred_check_branch
      %41 = sbr.rel (%p39) target = $region21
    $region20: #{tpu_custom_call.1} parent=1 // pred_region
      %v42 = vld [vmem:[#allocation3] sm:$0xff]
      %v43 = vmul.f32 %v42, %v42
      %vm44 = vcmask 261120
      %v45 = vsel %vm44, %v43, 0.0
      %46 = vadd.xlane.f32.xlu0 %v45
      %v47 = vpop.xlane.xlu0 %46
      %v48 = vmax.f32 %v47, 1e-24
      %v49 = vrsqrt.pop %v48
      %v50 = vmul.f32 %v42, %v49
      %51 = vst.msk [vmem:[#allocation2] sm:$0xff] %vm44, %v50
    $region21: #{tpu_custom_call.1} parent=1 // pred_fallthru
      _
    %s52 = smul.u32 0, 32
    %s53 = scalar_lea.vmem [#allocation6], %s52
    %v54 = vld [vmem:[%s53] sm:$0xff]
    %v55 = vld [vmem:[%s53 + $0x8] sm:$0xff]
    %v56 = vld [vmem:[%s53 + $0x10] sm:$0xff]
    %v57 = vld [vmem:[%s53 + $0x18] sm:$0xff]
    %v58 = vld [vmem:[#allocation2] sm:$0xff]
    %vm59 = vcmask 261120
    %v61 = vsel %vm59, %v58, 0
    %63 = vmatprep.subr.mxu0 0.0
    %64 = vmatpush1.msra.mxu0 %v54
    %65 = vmatprep.subr.mxu0 0.0
    %66 = vmatpush1.msra.mxu0 %v55
    %67 = vmatprep.subr.mxu0 0.0
    %68 = vmatpush1.msra.mxu0 %v56
    %69 = vmatprep.subr.mxu0 0.0
    %70 = vmatpush1.msra.mxu0 %v57
    %71 = vmatprep.subr.mxu0 0.0
    %72 = vmatpush1.msra.mxu0 0.0
    %73 = vmatprep.subr.mxu0 0.0
    %74 = vmatpush1.msra.mxu0 0.0
    %75 = vmatprep.subr.mxu0 0.0
    %76 = vmatpush1.msra.mxu0 0.0
    %77 = vmatprep.subr.mxu0 0.0
    %78 = vmatpush1.msra.mxu0 0.0
    %79 = vmatprep.subr.mxu0 0.0
    %80 = vmatpush1.msra.mxu0 0.0
    %81 = vmatprep.subr.mxu0 0.0
    %82 = vmatpush1.msra.mxu0 0.0
    %83 = vmatprep.subr.mxu0 0.0
    %84 = vmatpush1.msra.mxu0 0.0
    %85 = vmatprep.subr.mxu0 0.0
    %86 = vmatpush1.msra.mxu0 0.0
    %87 = vmatprep.subr.mxu0 0.0
    %88 = vmatpush1.msra.mxu0 0.0
    %89 = vmatprep.subr.mxu0 0.0
    %90 = vmatpush1.msra.mxu0 0.0
    %91 = vmatprep.subr.mxu0 0.0
    %92 = vmatpush1.msra.mxu0 0.0
    %93 = vmatprep.subr.mxu0 0.0
    %94 = vmatpush1.msra.mxu0 0.0
    %95 = vmatprep.subr.mxu0 0.0
    %96 = vmatpush1.msra.mxu0 0.0
    %97 = vmatprep.subr.mxu0 0.0
    %98 = vmatpush1.msra.mxu0 0.0
    %99 = vmatprep.subr.mxu0 0.0
    %100 = vmatpush1.msra.mxu0 0.0
    %101 = vmatprep.subr.mxu0 0.0
    %102 = vmatpush1.msra.mxu0 0.0
    %103 = vmatprep.subr.mxu0 0.0
    %104 = vmatpush1.msra.mxu0 0.0
    %105 = vmatprep.subr.mxu0 0.0
    %106 = vmatpush1.msra.mxu0 0.0
    %107 = vmatprep.subr.mxu0 0.0
    %108 = vmatpush1.msra.mxu0 0.0
    %109 = vmatprep.subr.mxu0 0.0
    %110 = vmatpush1.msra.mxu0 0.0
    %111 = vmatprep.subr.mxu0 0.0
    %112 = vmatpush1.msra.mxu0 0.0
    %113 = vmatprep.subr.mxu0 0.0
    %114 = vmatpush1.msra.mxu0 0.0
    %115 = vmatprep.subr.mxu0 0.0
    %116 = vmatpush1.msra.mxu0 0.0
    %117 = vmatprep.subr.mxu0 0.0
    %118 = vmatpush1.msra.mxu0 0.0
    %119 = vmatprep.subr.mxu0 0.0
    %120 = vmatpush1.msra.mxu0 0.0
    %121 = vmatprep.subr.mxu0 0.0
    %122 = vmatpush1.msra.mxu0 0.0
    %123 = vmatprep.subr.mxu0 0.0
    %124 = vmatpush1.msra.mxu0 0.0
    %125 = vmatprep.subr.mxu0 0.0
    %126 = vmatpush1.msra.mxu0 0.0
    %127 = vmatprep.mubr.f32.mxu0 0.0
    %128 = vmatmul.mubr.f32.gmra.mrb[0].mxu0 %v61
    %v129 = vpop.f32.mrb[0].mxu0
    %v130 = vadd.f32 0.0, %v129
    %v131 = vpop.f32.mrb[0].mxu0
    %132 = vdwg.mxu0
    %133 = vst [vmem:[#allocation8] sm:$0xff] %v130
    // Predicated region
    $region22: #{tpu_custom_call.1} parent=1 // pred_check
      _
    $region23: #{tpu_custom_call.1} parent=1 // pred_check_branch
      %135 = sbr.rel (0) target = $region25
    $region24: #{tpu_custom_call.1} parent=1 // pred_region
      %s137 = ssub.s32 128, 128
      %138 = vsyncadd [#allocation5], %s137
      %s140 = sshll.u32 [#allocation8], 4
      %s141 = int_to_ptr.vmem [resolvable:$true] %s140
      %143 = dma.vmem_to_hbm [thread:$0]  %s141, 128, %s2, [#allocation5]
    $region25: #{tpu_custom_call.1} parent=1 // pred_fallthru
      _
    // Predicated region
    $region26: #{tpu_custom_call.1} parent=1 // pred_check
      _
    $region27: #{tpu_custom_call.1} parent=1 // pred_check_branch
      %145 = sbr.rel (0) target = $region29
    $region28: #{tpu_custom_call.1} parent=1 // pred_region
      %146 = dma.done [#allocation5], 128
    $region29: #{tpu_custom_call.1} parent=1 // pred_fallthru
      _
    %147 = vsyncpa [#allocation4], 1
    %148 = vsyncpa [#allocation7], 1
    %149 = vsyncpa [#allocation5], 1

</llo_original>
